<compile_context>
chip_gen: v6e
topology: v6e:2x2x1
jax: 0.10.0
libtpu: 0.0.40
codegen_flags: <defaults>
</compile_context>

<pallas_src>
import jax
import jax.numpy as jnp
from jax.experimental import pallas as pl
from jax.experimental.pallas import tpu as pltpu

INPUT_DIM = 24
OUTPUT_DIM = 3
BATCH = 32


def linear_softmax_kernel(x_ref, wt_ref, b_ref, o_ref):
    # x_ref: (bm, D), wt_ref: (D, O) [pre-transposed in wrapper], b_ref: (1, O), o_ref: (bm, O)
    x = x_ref[...].astype(jnp.float32)
    wt = wt_ref[...].astype(jnp.float32)
    b = b_ref[...].astype(jnp.float32)

    # Linear: (bm, D) @ (D, O) on the MXU with f32 accumulation; bias broadcast-add on the VPU.
    logits = jnp.dot(x, wt, preferred_element_type=jnp.float32) + b

    # Numerically stable softmax over the O=3 feature axis. Mosaic masks padded lanes in the
    # axis=-1 reductions, so this is correct and keeps vreg pressure low at large bm.
    m = jnp.max(logits, axis=-1, keepdims=True)
    e = jnp.exp(logits - m)
    denom = jnp.sum(e, axis=-1, keepdims=True)

    # Exact reciprocal (approx=True would need a Newton step to hold 1e-5 tolerance).
    o_ref[...] = (e * pl.reciprocal(denom, approx=False)).astype(o_ref.dtype)


def _round_up(x, m):
    return ((x + m - 1) // m) * m


def _pick_block_rows(n, cap):
    """Pick the row-block size.

    Goals: (a) as large as possible (amortize ~0.35 us/step grid overhead) while staying under
    v5e's 16 MiB scoped-VMEM default at ~2 KB/row; (b) at least 2 (and an even number of)
    blocks whenever feasible so v7x's two TensorCores both get work under "parallel".
    """
    if n <= 8:
        return n  # single tiny block; block row-count equals the full batch dim (valid layout)
    nb = max(2, pl.cdiv(n, cap))   # >= 2 blocks so the megacore axis can actually be sharded
    if nb % 2:
        nb += 1                    # even block count -> balanced split across 2 TensorCores
    bm = _round_up(pl.cdiv(n, nb), 8)  # 8-aligned sublane rows (last partial block is clamped)
    return min(bm, n)


def simple_model_forward(x, w, b, *, block_rows_cap=4096):
    n, d = x.shape
    o = w.shape[0]

    # One-time, wrapper-side relayouts (free: the weight/bias tiles are grid-resident).
    wt = jnp.transpose(w)          # (O, D) -> (D, O): kernel contracts ((1,),(0,)) directly
    b2 = b.reshape(1, o)

    bm = _pick_block_rows(n, block_rows_cap)
    grid = (pl.cdiv(n, bm),)

    cost = pl.CostEstimate(
        flops=2 * n * d * o + 4 * n * o,           # matmul + softmax elementwise work
        transcendentals=n * o,                      # exp
        bytes_accessed=4 * (n * d + d * o + o + n * o),
    )

    return pl.pallas_call(
        linear_softmax_kernel,
        out_shape=jax.ShapeDtypeStruct((n, o), jnp.float32),
        grid=grid,
        in_specs=[
            pl.BlockSpec((bm, d), lambda i: (i, 0),
                         memory_space=pltpu.MemorySpace.VMEM),
            pl.BlockSpec((d, o), lambda i: (0, 0),        # weight resident across row blocks
                         memory_space=pltpu.MemorySpace.VMEM),
            pl.BlockSpec((1, o), lambda i: (0, 0),        # bias resident across row blocks
                         memory_space=pltpu.MemorySpace.VMEM),
        ],
        out_specs=pl.BlockSpec((bm, o), lambda i: (i, 0),
                               memory_space=pltpu.MemorySpace.VMEM),
        compiler_params=pltpu.CompilerParams(
            dimension_semantics=("parallel",),            # v7x: both TCs split the batch blocks
        ),
        cost_estimate=cost,
    )(x, wt, b2)


if __name__ == "__main__":
    key = jax.random.PRNGKey(0)
    kx, kw, kb = jax.random.split(key, 3)

    # Deterministic synthetic inputs / parameters matching nn.Linear(24, 3) on a (32, 24) batch.
    x = jax.random.uniform(kx, (BATCH, INPUT_DIM), dtype=jnp.float32)
    bound = 1.0 / (INPUT_DIM ** 0.5)  # PyTorch default Linear init range
    w = jax.random.uniform(kw, (OUTPUT_DIM, INPUT_DIM), minval=-bound, maxval=bound,
                           dtype=jnp.float32)
    b = jax.random.uniform(kb, (OUTPUT_DIM,), minval=-bound, maxval=bound,
                           dtype=jnp.float32)

    out = simple_model_forward(x, w, b)
    jax.block_until_ready(out)

    # Cross-check against pure-JAX reference.
    ref = jax.nn.softmax(x @ w.T + b, axis=1)
    assert out.shape == (BATCH, OUTPUT_DIM)
    assert jnp.allclose(out, ref, atol=1e-5, rtol=1e-5)
    assert jnp.allclose(jnp.sum(out, axis=1), 1.0, atol=1e-5)

    print("KERNEL_OK")
</pallas_src>

<mosaic_0001>
module attributes {stable_mosaic.version = 11 : i64} {
  func.func @linear_softmax_kernel(%arg0: i32, %arg1: memref<16x24xf32, #tpu.memory_space<vmem>>, %arg2: memref<24x3xf32, #tpu.memory_space<vmem>>, %arg3: memref<1x3xf32, #tpu.memory_space<vmem>>, %arg4: memref<16x3xf32, #tpu.memory_space<vmem>>) attributes {dimension_semantics = [#tpu.dimension_semantics<parallel>], iteration_bounds = array<i64: 2>, scalar_prefetch = 0 : i64, scratch_operands = 0 : i64, tpu.core_type = #tpu.core_type<tc>, window_params = [{transform_indices = @transform_0, window_bounds = array<i64: 16, 24>}, {pipeline_mode = #tpu.pipeline_mode<synchronous>, transform_indices = @transform_1, window_bounds = array<i64: 24, 3>}, {pipeline_mode = #tpu.pipeline_mode<synchronous>, transform_indices = @transform_2, window_bounds = array<i64: 1, 3>}, {transform_indices = @transform_3, window_bounds = array<i64: 16, 3>}]} {
    %c0 = arith.constant 0 : index
    %c0_0 = arith.constant 0 : index
    %0 = vector.load %arg1[%c0, %c0_0] : memref<16x24xf32, #tpu.memory_space<vmem>>, vector<16x24xf32>
    %c0_1 = arith.constant 0 : index
    %c0_2 = arith.constant 0 : index
    %1 = vector.load %arg2[%c0_1, %c0_2] : memref<24x3xf32, #tpu.memory_space<vmem>>, vector<24x3xf32>
    %c0_3 = arith.constant 0 : index
    %c0_4 = arith.constant 0 : index
    %2 = vector.load %arg3[%c0_3, %c0_4] : memref<1x3xf32, #tpu.memory_space<vmem>>, vector<1x3xf32>
    %cst = arith.constant dense<0.000000e+00> : vector<16x3xf32>
    %3 = tpu.matmul %0, %1, %cst {dimension_numbers = #tpu.dot_dimension_numbers<[1], [0], [0], [1], [0, 0, 1, 1], [], []>} : vector<16x24xf32>, vector<24x3xf32>, vector<16x3xf32> -> vector<16x3xf32>
    %4 = vector.broadcast %2 : vector<1x3xf32> to vector<16x3xf32>
    %5 = arith.addf %3, %4 : vector<16x3xf32>
    %cst_5 = arith.constant dense<0xFF800000> : vector<16xf32>
    %6 = vector.multi_reduction <maximumf>, %5, %cst_5 [1] : vector<16x3xf32> to vector<16xf32>
    %7 = vector.shape_cast %6 : vector<16xf32> to vector<16x1xf32>
    %8 = vector.broadcast %7 : vector<16x1xf32> to vector<16x3xf32>
    %9 = arith.subf %5, %8 : vector<16x3xf32>
    %10 = math.exp %9 : vector<16x3xf32>
    %cst_6 = arith.constant dense<0.000000e+00> : vector<16xf32>
    %11 = vector.multi_reduction <add>, %10, %cst_6 [1] : vector<16x3xf32> to vector<16xf32>
    %12 = vector.shape_cast %11 : vector<16xf32> to vector<16x1xf32>
    %13 = tpu.reciprocal %12 : vector<16x1xf32> -> vector<16x1xf32>
    %14 = vector.broadcast %13 : vector<16x1xf32> to vector<16x3xf32>
    %15 = arith.mulf %10, %14 : vector<16x3xf32>
    %c0_7 = arith.constant 0 : index
    %c0_8 = arith.constant 0 : index
    %16 = vector.load %arg4[%c0_7, %c0_8] : memref<16x3xf32, #tpu.memory_space<vmem>>, vector<16x3xf32>
    tpu.vector_store %arg4[%c0_7, %c0_8], %15 {strides = array<i32>} : memref<16x3xf32, #tpu.memory_space<vmem>>, vector<16x3xf32>,
    return
  }
  func.func @transform_0(%arg0: i32) -> (i32, i32) {
    %c0_i32 = arith.constant 0 : i32
    %c0_i32_0 = arith.constant 0 : i32
    return %arg0, %c0_i32 : i32, i32
  }
  func.func @transform_1(%arg0: i32) -> (i32, i32) {
    %c0_i32 = arith.constant 0 : i32
    %c0_i32_0 = arith.constant 0 : i32
    %c0_i32_1 = arith.constant 0 : i32
    return %c0_i32, %c0_i32_0 : i32, i32
  }
  func.func @transform_2(%arg0: i32) -> (i32, i32) {
    %c0_i32 = arith.constant 0 : i32
    %c0_i32_0 = arith.constant 0 : i32
    %c0_i32_1 = arith.constant 0 : i32
    return %c0_i32, %c0_i32_0 : i32, i32
  }
  func.func @transform_3(%arg0: i32) -> (i32, i32) {
    %c0_i32 = arith.constant 0 : i32
    %c0_i32_0 = arith.constant 0 : i32
    return %arg0, %c0_i32 : i32, i32
  }
}

</mosaic_0001>

<llo_original>
// kernel: tpu_custom_call.1
$region0: #{tpu_custom_call.1}
  #allocation0 [shape = 'u32[]', space=smem, size = 0x4, offset = 0x4, fixed_abs, tag = 'smem constant byte address 0x4 - core index']
  #allocation1 [shape = 'u32[144,128]{1,0:T(1,128)}', space=vmem, size = 0x12000, scoped, tag = 'internal scratch']
  %s0 = inlined_call_operand.vmem [shape: f32[32,24], index: 0, kind: input, shape index: {}]
  %s1 = inlined_call_operand.vmem [shape: f32[24,3], index: 1, kind: input, shape index: {}]
  %s2 = inlined_call_operand.vmem [shape: f32[1,3], index: 2, kind: input, shape index: {}]
  %s3 = inlined_call_operand.vmem [shape: f32[32,3], index: 3, kind: output, shape index: {}]
  %s4 = sld [smem:[#allocation0]]
  $region45: #{tpu_custom_call.1} parent=0
    _
  %s6 = ssub.s32 1, %s4
  %s7 = scalar_select 0, %s6, %s4
  loop: start=0, step=1, limit=4
  $region2: #{tpu_custom_call.1} parent=0 // loop_pre_header
    _
  $region3: #{tpu_custom_call.1} parent=0 // loop_header
    %s9 = sphi 0, %s13
    %p10 = scmp.ge.s32.totalorder %s9, 4
    %s19 = sphi 0, %s21
    %s22 = sphi 0, %s19
    %s23 = sphi 0, %s22
    %s39 = sphi 0, %s23
    %s43 = sphi 0, %s43
    %s45 = sphi 0, %s43
    %s46 = sphi 0, %s45
    %s60 = sphi 0, %s46
    %s64 = sphi 0, %s64
    %s66 = sphi 0, %s64
    %s67 = sphi 0, %s66
    %s81 = sphi 0, %s67
    %s87 = sphi 0, %s89
    %s90 = sphi 0, %s87
    %s91 = sphi 0, %s90
    %s107 = sphi 0, %s91
  $region4: #{tpu_custom_call.1} parent=0 // loop_header_branch
    %12 = sbr.rel (%p10) target = $region8
  $region5: #{tpu_custom_call.1} parent=0 // loop_body
    %s14 = ssub.s32 %s9, 1
    %s15 = ssub.s32 %s9, 2
    %s16 = sadd.s32 %s9, 1
    %s17 = ssub.s32 %s9, %s16
    %p18 = scmp.eq.s32.totalorder %s17, 0
    %s20 = sadd.s32 %s19, 1
    %s21 = scalar_select %p18, %s19, %s20
    %p24 = pneg %p18
    %p25 = scmp.eq.s32.totalorder %s9, 1
    %p26 = por %p24, %p25
    %p27 = scmp.ne.s32.totalorder %s19, %s22
    %p28 = scmp.eq.s32.totalorder %s9, 0
    %p29 = por %p27, %p28
    %p30 = scmp.ne.s32.totalorder %s19, %s22
    %p31 = scmp.eq.s32.totalorder %s14, 1
    %p32 = por %p30, %p31
    %p33 = scmp.ne.s32.totalorder %s22, %s23
    %p34 = scmp.eq.s32.totalorder %s14, 0
    %p35 = por %p33, %p34
    %p36 = scmp.ne.s32.totalorder %s22, %s23
    %p37 = scmp.eq.s32.totalorder %s15, 1
    %p38 = por %p36, %p37
    %p40 = scmp.ne.s32.totalorder %s23, %s39
    %p41 = scmp.eq.s32.totalorder %s15, 0
    %p42 = por %p40, %p41
    %s44 = sadd.s32 %s43, 1
    %p47 = scmp.eq.s32.totalorder %s9, 1
    %p48 = scmp.ne.s32.totalorder %s43, %s45
    %p49 = scmp.eq.s32.totalorder %s9, 0
    %p50 = por %p48, %p49
    %p51 = scmp.ne.s32.totalorder %s43, %s45
    %p52 = scmp.eq.s32.totalorder %s14, 1
    %p53 = por %p51, %p52
    %p54 = scmp.ne.s32.totalorder %s45, %s46
    %p55 = scmp.eq.s32.totalorder %s14, 0
    %p56 = por %p54, %p55
    %p57 = scmp.ne.s32.totalorder %s45, %s46
    %p58 = scmp.eq.s32.totalorder %s15, 1
    %p59 = por %p57, %p58
    %p61 = scmp.ne.s32.totalorder %s46, %s60
    %p62 = scmp.eq.s32.totalorder %s15, 0
    %p63 = por %p61, %p62
    %s65 = sadd.s32 %s64, 1
    %p68 = scmp.eq.s32.totalorder %s9, 1
    %p69 = scmp.ne.s32.totalorder %s64, %s66
    %p70 = scmp.eq.s32.totalorder %s9, 0
    %p71 = por %p69, %p70
    %p72 = scmp.ne.s32.totalorder %s64, %s66
    %p73 = scmp.eq.s32.totalorder %s14, 1
    %p74 = por %p72, %p73
    %p75 = scmp.ne.s32.totalorder %s66, %s67
    %p76 = scmp.eq.s32.totalorder %s14, 0
    %p77 = por %p75, %p76
    %p78 = scmp.ne.s32.totalorder %s66, %s67
    %p79 = scmp.eq.s32.totalorder %s15, 1
    %p80 = por %p78, %p79
    %p82 = scmp.ne.s32.totalorder %s67, %s81
    %p83 = scmp.eq.s32.totalorder %s15, 0
    %p84 = por %p82, %p83
    %s85 = ssub.s32 %s9, %s16
    %p86 = scmp.eq.s32.totalorder %s85, 0
    %s88 = sadd.s32 %s87, 1
    %s89 = scalar_select %p86, %s87, %s88
    %p92 = pneg %p86
    %p93 = scmp.eq.s32.totalorder %s9, 1
    %p94 = por %p92, %p93
    %p95 = scmp.ne.s32.totalorder %s87, %s90
    %p96 = scmp.eq.s32.totalorder %s9, 0
    %p97 = por %p95, %p96
    %p98 = scmp.ne.s32.totalorder %s87, %s90
    %p99 = scmp.eq.s32.totalorder %s14, 1
    %p100 = por %p98, %p99
    %p101 = scmp.ne.s32.totalorder %s90, %s91
    %p102 = scmp.eq.s32.totalorder %s14, 0
    %p103 = por %p101, %p102
    %p104 = scmp.ne.s32.totalorder %s90, %s91
    %p105 = scmp.eq.s32.totalorder %s15, 1
    %p106 = por %p104, %p105
    %p108 = scmp.ne.s32.totalorder %s91, %s107
    %p109 = scmp.eq.s32.totalorder %s15, 0
    %p110 = por %p108, %p109
    %p111 = scmp.le.s32.totalorder 1, %s9
    %p112 = scmp.lt.s32.totalorder %s9, 3
    %p113 = pnand %p111, %p112
    %p114 = pneg %p113
    // Predicated region
    $region9: #{tpu_custom_call.1} parent=5 // pred_check
      _
    $region10: #{tpu_custom_call.1} parent=5 // pred_check_branch
      %116 = sbr.rel (%p113) target = $region12
    $region11: #{tpu_custom_call.1} parent=5 // pred_region
      %s117 = ssub.s32 %s9, 1
      // Predicated region
      $region13: #{tpu_custom_call.1} parent=11 // pred_check
        %p118 = pneg %p56
      $region14: #{tpu_custom_call.1} parent=11 // pred_check_branch
        %120 = sbr.rel (%p118) target = $region16
      $region15: #{tpu_custom_call.1} parent=11 // pred_region
        _
      $region16: #{tpu_custom_call.1} parent=11 // pred_fallthru
        _
      // Predicated region
      $region17: #{tpu_custom_call.1} parent=11 // pred_check
        %p121 = pneg %p77
      $region18: #{tpu_custom_call.1} parent=11 // pred_check_branch
        %123 = sbr.rel (%p121) target = $region20
      $region19: #{tpu_custom_call.1} parent=11 // pred_region
        _
      $region20: #{tpu_custom_call.1} parent=11 // pred_fallthru
        _
    $region12: #{tpu_custom_call.1} parent=5 // pred_fallthru
      _
    %p124 = scmp.lt.s32.totalorder %s9, 2
    // Predicated region
    $region21: #{tpu_custom_call.1} parent=5 // pred_check
      %p125 = pneg %p124
    $region22: #{tpu_custom_call.1} parent=5 // pred_check_branch
      %127 = sbr.rel (%p125) target = $region24
    $region23: #{tpu_custom_call.1} parent=5 // pred_region
      // Predicated region
      $region25: #{tpu_custom_call.1} parent=23 // pred_check
        %p128 = pneg %p29
      $region26: #{tpu_custom_call.1} parent=23 // pred_check_branch
        %130 = sbr.rel (%p128) target = $region28
      $region27: #{tpu_custom_call.1} parent=23 // pred_region
        %s131 = smul.u32 2, %s9
        %p132 = scmp.lt.s32.totalorder %s131, 3
        %s133 = scalar_select %p132, %s131, 3
        %s134 = smul.addr %s133, 8
        %s135 = scalar_lea.vmem %s0, %s134
        %s136 = smul.u32 2, %s9
      $region28: #{tpu_custom_call.1} parent=23 // pred_fallthru
        _
    $region24: #{tpu_custom_call.1} parent=5 // pred_fallthru
      _
    %p137 = scmp.le.s32.totalorder 1, %s9
    %p138 = scmp.lt.s32.totalorder %s9, 3
    %p139 = pnand %p137, %p138
    %p140 = pneg %p139
    // Predicated region
    $region29: #{tpu_custom_call.1} parent=5 // pred_check
      _
    $region30: #{tpu_custom_call.1} parent=5 // pred_check_branch
      %142 = sbr.rel (%p139) target = $region32
    $region31: #{tpu_custom_call.1} parent=5 // pred_region
      %s143 = ssub.s32 %s9, 1
      %s144 = smul.u32 2, %s14
      %p145 = scmp.lt.s32.totalorder %s144, 3
      %s146 = scalar_select %p145, %s144, 3
      %s147 = smul.addr %s146, 8
      %s148 = scalar_lea.vmem %s0, %s147
      %p149 = pneg %p35
      %p150 = pneg %p32
      %p151 = pneg %p56
      %p152 = pneg %p53
      %p153 = pneg %p77
      %p154 = pneg %p74
      %p155 = pneg %p103
      %p156 = pneg %p100
      %s157 = smul.u32 2, %s14
      %p158 = scmp.lt.s32.totalorder %s157, 3
      %s159 = scalar_select %p158, %s157, 3
      %s160 = smul.addr %s159, 8
      %s161 = scalar_lea.vmem %s3, %s160
      %s162 = smul.u32 2, %s14
      %p163 = scmp.lt.s32.totalorder %s162, 3
      %s164 = scalar_select %p163, %s162, 3
      %s165 = smul.addr %s164, 8
      %s166 = scalar_lea.vmem %s0, %s165
      %s167 = smul.u32 2, %s14
      %s168 = smul.u32 2, %s14
      %p169 = scmp.lt.s32.totalorder %s168, 3
      %s170 = scalar_select %p169, %s168, 3
      %s171 = smul.addr %s170, 8
      %s172 = scalar_lea.vmem %s3, %s171
      %s173 = smul.u32 2, %s14
      %v174 = vld [vmem:[%s166] sm:$0xff]
      %v175 = vld [vmem:[%s166 + $0x8] sm:$0xff]
      %v176 = vld [vmem:[%s1] sm:$0xff]
      %v177 = vld [vmem:[%s1 + $0x8] sm:$0xff]
      %v178 = vld [vmem:[%s1 + $0x10] sm:$0xff]
      %v179 = vld [vmem:[%s2] sm:$0x1]
      %v181 = vlaneseq
      %v182 = vshrl.u32 %v181, 7
      %v183 = vsub.s32 0, %v182
      %v184 = vrot.slane %v179, %v183
      %vm186 = vcmask 195584
      %v188 = vsel %vm186, %v174, 0
      %v191 = vsel %vm186, %v175, 0
      %193 = vmatprep.subr.mxu0 0.0
      %194 = vmatpush1.msra.mxu0 0.0
      %195 = vmatprep.subr.mxu0 0.0
      %196 = vmatpush1.msra.mxu0 0.0
      %197 = vmatprep.subr.mxu0 0.0
      %198 = vmatpush1.msra.mxu0 0.0
      %199 = vmatprep.subr.mxu0 0.0
      %200 = vmatpush1.msra.mxu0 0.0
      %201 = vmatprep.subr.mxu0 0.0
      %202 = vmatpush1.msra.mxu0 0.0
      %203 = vmatprep.subr.mxu0 0.0
      %204 = vmatpush1.msra.mxu0 0.0
      %205 = vmatprep.subr.mxu0 0.0
      %206 = vmatpush1.msra.mxu0 0.0
      %207 = vmatprep.subr.mxu0 0.0
      %208 = vmatpush1.msra.mxu0 0.0
      %209 = vmatprep.subr.mxu0 0.0
      %210 = vmatpush1.msra.mxu0 0.0
      %211 = vmatprep.subr.mxu0 0.0
      %212 = vmatpush1.msra.mxu0 0.0
      %213 = vmatprep.subr.mxu0 0.0
      %214 = vmatpush1.msra.mxu0 0.0
      %215 = vmatprep.subr.mxu0 0.0
      %216 = vmatpush1.msra.mxu0 0.0
      %217 = vmatprep.subr.mxu0 0.0
      %218 = vmatpush1.msra.mxu0 0.0
      %219 = vmatprep.subr.mxu0 0.0
      %220 = vmatpush1.msra.mxu0 %v178
      %221 = vmatprep.subr.mxu0 0.0
      %222 = vmatpush1.msra.mxu0 %v177
      %223 = vmatprep.subr.mxu0 0.0
      %224 = vmatpush1.msra.mxu0 %v176
      %225 = vmatprep.subr.mxu0 0.0
      %226 = vmatpush2.msra.mxu0 0.0
      %227 = vmatprep.subr.mxu0 0.0
      %228 = vmatpush2.msra.mxu0 0.0
      %229 = vmatprep.subr.mxu0 0.0
      %230 = vmatpush2.msra.mxu0 0.0
      %231 = vmatprep.subr.mxu0 0.0
      %232 = vmatpush2.msra.mxu0 0.0
      %233 = vmatprep.subr.mxu0 0.0
      %234 = vmatpush2.msra.mxu0 0.0
      %235 = vmatprep.subr.mxu0 0.0
      %236 = vmatpush2.msra.mxu0 0.0
      %237 = vmatprep.subr.mxu0 0.0
      %238 = vmatpush2.msra.mxu0 0.0
      %239 = vmatprep.subr.mxu0 0.0
      %240 = vmatpush2.msra.mxu0 0.0
      %241 = vmatprep.subr.mxu0 0.0
      %242 = vmatpush2.msra.mxu0 0.0
      %243 = vmatprep.subr.mxu0 0.0
      %244 = vmatpush2.msra.mxu0 0.0
      %245 = vmatprep.subr.mxu0 0.0
      %246 = vmatpush2.msra.mxu0 0.0
      %247 = vmatprep.subr.mxu0 0.0
      %248 = vmatpush2.msra.mxu0 0.0
      %249 = vmatprep.subr.mxu0 0.0
      %250 = vmatpush2.msra.mxu0 0.0
      %251 = vmatprep.subr.mxu0 0.0
      %252 = vmatpush2.msra.mxu0 0.0
      %253 = vmatprep.subr.mxu0 0.0
      %254 = vmatpush2.msra.mxu0 0.0
      %255 = vmatprep.subr.mxu0 0.0
      %256 = vmatpush2.msra.mxu0 0.0
      %257 = vmatprep.mubr.f32.mxu0 0.0
      %258 = vmatmul.mubr.f32.gmra.mxu0 %v188
      %v259 = vpop.f32.mrf.mxu0
      %v260 = vadd.f32 %v184, %v259
      %v261 = vpop.f32.mrf.mxu0
      %262 = vmatprep.mubr.f32.mxu0 0.0
      %263 = vmatmul.mubr.f32.gmra.mxu0 %v191
      %v264 = vpop.f32.mrf.mxu0
      %v265 = vadd.f32 %v184, %v264
      %v266 = vpop.f32.mrf.mxu0
      %267 = vdwg.mxu0
      %vm268 = vcmask 23552
      %v269 = vsel %vm268, %v260, -inf
      %270 = vmax.xlane.f32.xlu0 %v269
      %v271 = vpop.xlane.xlu0 %270
      %v272 = vsel %vm268, %v265, -inf
      %273 = vmax.xlane.f32.xlu0 %v272
      %v274 = vpop.xlane.xlu0 %273
      %v275 = vsub.f32 %v260, %v271
      %v276 = vsub.f32 %v265, %v274
      %v277 = vmul.f32 %v275, 1.442695
      %v278 = vpow.pop %v277
      %v279 = vmul.f32 %v276, 1.442695
      %v280 = vpow.pop %v279
      %v281 = vsel %vm268, %v278, 0.0
      %282 = vadd.xlane.f32.xlu0 %v281
      %v283 = vpop.xlane.xlu0 %282
      %v284 = vsel %vm268, %v280, 0.0
      %285 = vadd.xlane.f32.xlu0 %v284
      %v286 = vpop.xlane.xlu0 %285
      %v287 = vrcp.pop %v283
      %v288 = vrcp.pop %v286
      %v289 = vmul.f32 %v278, %v287
      %v290 = vmul.f32 %v280, %v288
      %291 = vst.msk [vmem:[%s172] sm:$0xff] %vm268, %v289
      %292 = vst.msk [vmem:[%s172 + $0x8] sm:$0xff] %vm268, %v290
      %s293 = smul.u32 2, %s14
      %p294 = scmp.lt.s32.totalorder %s293, 3
      %s295 = scalar_select %p294, %s293, 3
      %s296 = smul.addr %s295, 8
      %s297 = scalar_lea.vmem %s3, %s296
      // Predicated region
      $region33: #{tpu_custom_call.1} parent=31 // pred_check
        %p298 = pneg %p100
      $region34: #{tpu_custom_call.1} parent=31 // pred_check_branch
        %300 = sbr.rel (%p298) target = $region36
      $region35: #{tpu_custom_call.1} parent=31 // pred_region
        %s301 = smul.u32 2, %s14
      $region36: #{tpu_custom_call.1} parent=31 // pred_fallthru
        _
    $region32: #{tpu_custom_call.1} parent=5 // pred_fallthru
      _
    %p302 = scmp.le.s32.totalorder 2, %s9
    // Predicated region
    $region37: #{tpu_custom_call.1} parent=5 // pred_check
      %p303 = pneg %p302
    $region38: #{tpu_custom_call.1} parent=5 // pred_check_branch
      %305 = sbr.rel (%p303) target = $region40
    $region39: #{tpu_custom_call.1} parent=5 // pred_region
      %s306 = ssub.s32 %s9, 2
      // Predicated region
      $region41: #{tpu_custom_call.1} parent=39 // pred_check
        %p307 = pneg %p106
      $region42: #{tpu_custom_call.1} parent=39 // pred_check_branch
        %309 = sbr.rel (%p307) target = $region44
      $region43: #{tpu_custom_call.1} parent=39 // pred_region
        %s310 = smul.u32 2, %s15
        %p311 = scmp.lt.s32.totalorder %s310, 3
        %s312 = scalar_select %p311, %s310, 3
        %s313 = smul.addr %s312, 8
        %s314 = scalar_lea.vmem %s3, %s313
      $region44: #{tpu_custom_call.1} parent=39 // pred_fallthru
        _
    $region40: #{tpu_custom_call.1} parent=5 // pred_fallthru
      _
  $region6: #{tpu_custom_call.1} parent=0 // loop_footer
    %s13 = sadd.s32 1, %s9
  $region7: #{tpu_custom_call.1} parent=0 // loop_footer_branch
    %8 = sbr.rel target = $region3
  $region8: #{tpu_custom_call.1} parent=0 // loop_exit
    _

</llo_original>
